<compile_context>
chip_gen: v5e
topology: v5e:2x2
jax: 0.10.0
libtpu: 0.0.40
codegen_flags: <defaults>
</compile_context>

<pallas_src>
import math

import jax
import jax.numpy as jnp
from jax.experimental import pallas as pl
from jax.experimental.pallas import tpu as pltpu


def _copy_kernel(x_ref, o_ref):
    # Straight element copy of the current (TR, C) tile.
    o_ref[...] = x_ref[...]


# Candidate lane-dense slab widths (multiples of 128, widest first).
_LANE_WIDTHS = (16384, 8192, 4096, 2048, 1024, 512, 256, 128)
# ~2 MiB per tile -> ~8 MiB total with double-buffered input+output buffers,
# safe under the scoped-VMEM limits of v5e (16 MiB default), v6e and v7x.
_TARGET_TILE_BYTES = 2 * 1024 * 1024


def _resolve_shape(x: jax.Array, shape) -> tuple[int, int, tuple[int, ...]]:
    """Resolve a torch-.view-style target shape (supports a single -1)."""
    b = x.shape[0]
    flat_n = math.prod(x.shape[1:]) if x.ndim > 1 else 1
    shape = list(shape)
    if shape.count(-1) == 1:
        known = math.prod(s for s in shape if s != -1)
        shape[shape.index(-1)] = flat_n // known
    target_n = math.prod(shape) if shape else 1
    assert target_n == flat_n, (
        f"cannot view {x.shape} as (batch, {tuple(shape)}): "
        f"{flat_n} != {target_n} elements per batch row"
    )
    return b, flat_n, tuple(shape)


def _choose_slab(total_elems: int, itemsize: int):
    """Pick a lane-dense (R, C) view of the flat slab plus a row tile TR.

    C is a large multiple of 128 (full vreg lanes) and R a multiple of 8
    (full sublanes), so every load/store is an unmasked full-vreg op.
    Returns None when no such factorization exists.
    """
    for c in _LANE_WIDTHS:
        if total_elems % c:
            continue
        r = total_elems // c
        if r >= 8 and r % 8 == 0:
            # ~2 MiB row-tiles of the full-width slab.
            tr = max(8, (_TARGET_TILE_BYTES // (c * itemsize)) // 8 * 8)
            # Keep >= 2 grid steps when possible so v7x's two TensorCores
            # both get a share of the copy (grid axis is 'parallel').
            if r > 8:
                tr = min(tr, max(8, (r // 2) // 8 * 8))
            return r, c, min(tr, r)
    return None


def pallas_reshape(x: jax.Array, *shape: int, force_kernel: bool = False) -> jax.Array:
    """Equivalent of Reshape(*shape)(x): x reshaped to (x.shape[0], *shape).

    Default path is metadata-only (no data movement).  `force_kernel=True`
    routes the bytes through the Pallas copy kernel (used here to exercise
    and verify the kernel; also the hook point if a materialized copy into a
    fresh buffer is ever explicitly wanted).
    """
    b, flat_n, shape = _resolve_shape(x, shape)

    # Fast path (default): a view of contiguous data is metadata-only in XLA;
    # running a copy kernel would only add 2x HBM + 2x VMEM traffic.
    if not force_kernel:
        return x.reshape(b, *shape)

    total = b * flat_n
    slab = _choose_slab(total, jnp.dtype(x.dtype).itemsize)
    if slab is None:
        # No sublane/lane-clean factorization: a copy kernel would be pure
        # overhead and is never semantically required, so fall back.
        return x.reshape(b, *shape)

    r, c, tr = slab
    # Metadata-only re-view of the contiguous slab as a lane-dense matrix.
    x_slab = x.reshape(r, c)

    out = pl.pallas_call(
        _copy_kernel,
        out_shape=jax.ShapeDtypeStruct((r, c), x.dtype),
        grid_spec=pltpu.PrefetchScalarGridSpec(
            num_scalar_prefetch=0,
            grid=(pl.cdiv(r, tr),),
            in_specs=[pl.BlockSpec((tr, c), lambda i: (i, 0))],
            out_specs=pl.BlockSpec((tr, c), lambda i: (i, 0)),
        ),
        compiler_params=pltpu.CompilerParams(
            dimension_semantics=("parallel",),
            vmem_limit_bytes=32 * 1024 * 1024,
        ),
    )(x_slab)

    # Final metadata-only reshape to the requested trailing shape.
    return out.reshape(b, *shape)


if __name__ == "__main__":
    key = jax.random.PRNGKey(0)
    k0, k1 = jax.random.split(key)

    # Conv-style NCHW tensor: (batch=2, C=4, H=16, W=16).
    x = jax.random.normal(k0, (2, 4, 16, 16), dtype=jnp.float32)
    target_shape = (16, 64)
    y_ref = x.reshape(x.shape[0], *target_shape)

    # Default (optimal) path: metadata-only reshape, no kernel launch.
    y_fast = pallas_reshape(x, *target_shape)
    # Kernel path: exercise the Pallas copy once on a lane-dense slab.
    y_kern = pallas_reshape(x, *target_shape, force_kernel=True)
    jax.block_until_ready((y_fast, y_kern))

    assert y_fast.shape == (2, 16, 64) and y_kern.shape == (2, 16, 64)
    assert y_fast.dtype == x.dtype and y_kern.dtype == x.dtype
    assert bool(jnp.all(y_fast == y_ref)), "fast-path mismatch vs reference"
    assert bool(jnp.all(y_kern == y_ref)), "Pallas reshape mismatch vs reference"

    # torch-.view-style -1 inference: (2, 4, 16, 16) -> (2, 16, 64).
    y_neg = pallas_reshape(x, -1, 64)
    assert y_neg.shape == (2, 16, 64) and bool(jnp.all(y_neg == y_ref))

    # Slightly larger input so the kernel path uses a multi-step 'parallel'
    # grid (two row-tiles -> both v7x TensorCores participate); still ~1 MiB.
    x2 = jax.random.normal(k1, (8, 8, 64, 64), dtype=jnp.float32)
    y2 = pallas_reshape(x2, 64, 512, force_kernel=True)
    jax.block_until_ready(y2)
    assert y2.shape == (8, 64, 512)
    assert bool(jnp.all(y2 == x2.reshape(8, 64, 512)))

    print("KERNEL_OK")
</pallas_src>

<mosaic_0001>
module attributes {stable_mosaic.version = 11 : i64} {
  func.func @_copy_kernel(%arg0: i32, %arg1: memref<8x256xf32, #tpu.memory_space<vmem>>, %arg2: memref<8x256xf32, #tpu.memory_space<vmem>>) attributes {dimension_semantics = [#tpu.dimension_semantics<parallel>], iteration_bounds = array<i64: 1>, scalar_prefetch = 0 : i64, scratch_operands = 0 : i64, tpu.core_type = #tpu.core_type<tc>, window_params = [{transform_indices = @transform_0, window_bounds = array<i64: 8, 256>}, {transform_indices = @transform_1, window_bounds = array<i64: 8, 256>}]} {
    %c0 = arith.constant 0 : index
    %c0_0 = arith.constant 0 : index
    %0 = vector.load %arg1[%c0, %c0_0] : memref<8x256xf32, #tpu.memory_space<vmem>>, vector<8x256xf32>
    %c0_1 = arith.constant 0 : index
    %c0_2 = arith.constant 0 : index
    %1 = vector.load %arg2[%c0_1, %c0_2] : memref<8x256xf32, #tpu.memory_space<vmem>>, vector<8x256xf32>
    tpu.vector_store %arg2[%c0_1, %c0_2], %0 {strides = array<i32>} : memref<8x256xf32, #tpu.memory_space<vmem>>, vector<8x256xf32>,
    return
  }
  func.func @transform_0(%arg0: i32) -> (i32, i32) {
    %c0_i32 = arith.constant 0 : i32
    %c0_i32_0 = arith.constant 0 : i32
    return %arg0, %c0_i32 : i32, i32
  }
  func.func @transform_1(%arg0: i32) -> (i32, i32) {
    %c0_i32 = arith.constant 0 : i32
    %c0_i32_0 = arith.constant 0 : i32
    return %arg0, %c0_i32 : i32, i32
  }
}

</mosaic_0001>

<llo_original>
// kernel: tpu_custom_call.1
$region0: #{tpu_custom_call.1}
  #allocation0 [shape = 'u32[]', space=smem, size = 0x4, offset = 0x4, fixed_abs, tag = 'smem constant byte address 0x4 - core index']
  #allocation1 [shape = 'u32[72,128]{1,0:T(1,128)}', space=vmem, size = 0x9000, scoped, tag = 'internal scratch']
  %s0 = inlined_call_operand.hbm [shape: f32[8,256], index: 0, kind: input, shape index: {}]
  %s1 = inlined_call_operand.hbm [shape: f32[8,256], index: 1, kind: output, shape index: {}]
  %s2 = sld [smem:[#allocation0]]
  $region18: #{tpu_custom_call.1} parent=0
    _
  %s4 = ssub.s32 1, %s2
  %s5 = scalar_select 0, %s4, %s2
  $region1: #{tpu_custom_call.1} parent=0
    #allocation2 [shape = 'u8[8192]{0}', space=vmem, size = 0x2000, scoped, tag = 'input window, operand 0, single buffered']
    #allocation3 [shape = 's32[1]{0}', space=sflag, size = 0x4, scoped, tag = 'scoped memory for tpu_custom_call.1']
    #allocation4 [shape = 's32[1]{0}', space=sflag, size = 0x4, scoped, tag = 'scoped memory for tpu_custom_call.1']
    #allocation5 [shape = 'u8[8192]{0}', space=vmem, size = 0x2000, scoped, tag = 'output window, operand 0, single buffered']
    %6 = vsyncpa [#allocation3], 0
    %7 = vsyncpa [#allocation4], 0
    // Predicated region
    $region2: #{tpu_custom_call.1} parent=1 // pred_check
      _
    $region3: #{tpu_custom_call.1} parent=1 // pred_check_branch
      %9 = sbr.rel (0) target = $region5
    $region4: #{tpu_custom_call.1} parent=1 // pred_region
      %11 = vsyncadd [#allocation3], 0
      %s13 = sshll.u32 %s0, 4
      %s14 = int_to_ptr.hbm [resolvable:$true] %s13
      %s15 = sshll.u32 [#allocation2], 4
      %s16 = int_to_ptr.vmem [resolvable:$true] %s15
      %18 = dma.hbm_to_vmem [thread:$0]  %s14, 256, %s16, [#allocation3]
    $region5: #{tpu_custom_call.1} parent=1 // pred_fallthru
      _
    // Predicated region
    $region6: #{tpu_custom_call.1} parent=1 // pred_check
      _
    $region7: #{tpu_custom_call.1} parent=1 // pred_check_branch
      %20 = sbr.rel (0) target = $region9
    $region8: #{tpu_custom_call.1} parent=1 // pred_region
      %22 = dma.done [#allocation3], 256
    $region9: #{tpu_custom_call.1} parent=1 // pred_fallthru
      _
    %v23 = vld [vmem:[#allocation2] sm:$0xff]
    %v24 = vld [vmem:[#allocation2 + $0x8] sm:$0xff]
    %25 = vst [vmem:[#allocation5] sm:$0xff] %v23
    %26 = vst [vmem:[#allocation5 + $0x8] sm:$0xff] %v24
    // Predicated region
    $region10: #{tpu_custom_call.1} parent=1 // pred_check
      _
    $region11: #{tpu_custom_call.1} parent=1 // pred_check_branch
      %28 = sbr.rel (0) target = $region13
    $region12: #{tpu_custom_call.1} parent=1 // pred_region
      %30 = vsyncadd [#allocation4], 0
      %s32 = sshll.u32 [#allocation5], 4
      %s33 = int_to_ptr.vmem [resolvable:$true] %s32
      %s34 = sshll.u32 %s1, 4
      %s35 = int_to_ptr.hbm [resolvable:$true] %s34
      %37 = dma.vmem_to_hbm [thread:$0]  %s33, 256, %s35, [#allocation4]
    $region13: #{tpu_custom_call.1} parent=1 // pred_fallthru
      _
    // Predicated region
    $region14: #{tpu_custom_call.1} parent=1 // pred_check
      _
    $region15: #{tpu_custom_call.1} parent=1 // pred_check_branch
      %39 = sbr.rel (0) target = $region17
    $region16: #{tpu_custom_call.1} parent=1 // pred_region
      %41 = dma.done [#allocation4], 256
    $region17: #{tpu_custom_call.1} parent=1 // pred_fallthru
      _
    %42 = vsyncpa [#allocation3], 1
    %43 = vsyncpa [#allocation4], 1

</llo_original>
